<compile_context>
chip_gen: v7x
topology: tpu7x:2x2x1
jax: 0.10.0
libtpu: 0.0.40
codegen_flags: <defaults>
</compile_context>

<pallas_src>
import functools
import math

import jax
import jax.numpy as jnp
from jax.experimental import pallas as pl
from jax.experimental.pallas import tpu as pltpu


# ------------------------------ helpers ------------------------------------ #
def _round_up(x, m):
    return ((x + m - 1) // m) * m


def _choose_tiles(B, T, C, W, Hp, V):
    """Pick (tb, Bp, Vt, Vp, vmem_cap).

    tb: sequences per M-grid step, Bp: padded batch, Vt: vocab tile width,
    Vp: padded vocab, vmem_cap: physical VMEM used for sizing decisions.
    """
    Vp128 = _round_up(V, 128)
    Vt = min(Vp128, 1024)                 # 512-2048 column tiles (lane-dense)
    Vp = _round_up(V, Vt)

    try:                                  # generation-aware VMEM capacity
        cap = int(pltpu.get_tpu_info().vmem_capacity_bytes)
    except Exception:                     # conservative fallback (v7x size)
        cap = 64 << 20
    budget = int(cap * 0.55)              # headroom for compiler scratch

    Kc = W * C
    # Per-grid-step footprint, split into row-independent and per-row parts.
    fixed = (2 * Kc * Hp * 2 + 2 * Hp * 4          # w1 / b1 (double-buffered)
             + 2 * Hp * Vt * 2 + 2 * Vt * 4)       # w2 / b2 tiles
    per_row = (2 * C * 2                            # x tile (bf16, 2 buffers)
               + 2 * Vt * 2                         # logits tile (bf16, 2 bufs)
               + Kc * 2 + Hp * 2)                   # concat + hidden scratch

    target_rows = 2048 if cap >= (96 << 20) else 1024
    rows = max(T, min(target_rows, (budget - fixed) // per_row))
    tb = max(1, min(B, rows // T))

    # R = tb*T must be a multiple of 8 (16 preferred: bf16 sublane packing)
    # unless a single block spans the whole padded batch (full-extent block).
    step16 = 16 // math.gcd(T, 16)
    step8 = 8 // math.gcd(T, 8)
    if tb >= step16:
        tb = (tb // step16) * step16
    elif tb >= step8:
        tb = (tb // step8) * step8
    else:
        tb = B                                      # one full-extent M block

    # v7x megacore: give the "parallel" M axis at least 2 steps when legal.
    if tb >= B and B > 1:
        half = (B + 1) // 2
        if (half * T) % 8 == 0:
            tb = half

    Bp = _round_up(B, tb)
    return tb, Bp, Vt, Vp, cap


# ----------------------------- Pallas kernel ------------------------------- #
def _ngram_mlp_kernel(x_ref, w1_ref, b1_ref, w2_ref, b2_ref, o_ref,
                      cat_ref, h_ref, *, W, C):
    """Fused n-gram concat + fc1(Linear+ReLU) + fc2(Linear), V-tiled.

    x_ref  : (tb, T, C)   bf16  embeddings for tb whole sequences
    w1_ref : (W*C, Hp)    bf16  fc1 weight (resident across the grid)
    b1_ref : (1, Hp)      f32
    w2_ref : (Hp, Vt)     bf16  fc2 weight tile for this V step
    b2_ref : (1, Vt)      f32
    o_ref  : (R, Vt)      bf16  logits tile (lane-dense, R = tb*T)
    cat_ref: (tb, T, W*C) bf16  scratch: concatenated n-gram windows
    h_ref  : (R, Hp)      bf16  scratch: post-ReLU hidden, reused across V
    """
    tb, T, _ = x_ref.shape
    R = tb * T
    Kc = W * C

    @pl.when(pl.program_id(1) == 0)        # build hidden once per M tile
    def _build_hidden():
        # Concatenated windows: column block w holds x[t - (W-1-w)], with the
        # left zero-padding written straight into the slab (no masking ops).
        for w in range(W):
            s = W - 1 - w                  # row shift for this window slot
            lo, hi = w * C, (w + 1) * C
            if s == 0:
                cat_ref[:, :, lo:hi] = x_ref[...]
            elif s >= T:
                cat_ref[:, :, lo:hi] = jnp.zeros((tb, T, C), cat_ref.dtype)
            else:
                cat_ref[:, :s, lo:hi] = jnp.zeros((tb, s, C), cat_ref.dtype)
                cat_ref[:, s:, lo:hi] = x_ref[:, :T - s, :]

        # Single lane-dense matmul over the full contraction depth K = W*C.
        xcat = cat_ref[...].reshape(R, Kc)
        h = jnp.dot(xcat, w1_ref[...], preferred_element_type=jnp.float32)
        h = jnp.maximum(h + b1_ref[...], 0.0)
        # TODO(synk): nn.Dropout is identity in eval mode; training-mode
        # dropout (pltpu.prng_random_bits mask) intentionally not applied.
        h_ref[...] = h.astype(h_ref.dtype)

    # fc2 for this vocab tile; bf16 store halves the HBM writeback stream.
    o_ref[...] = (jnp.dot(h_ref[...], w2_ref[...],
                          preferred_element_type=jnp.float32)
                  + b2_ref[...]).astype(o_ref.dtype)


# ------------------------------ JAX wrapper -------------------------------- #
@functools.partial(jax.jit, static_argnames=("block_size",))
def ngram_forward(tokens, params, block_size):
    """Forward pass (target=None path): returns bf16 logits (B, T, V)."""
    emb_table = params["emb"]
    w1, b1, w2, b2 = params["w1"], params["b1"], params["w2"], params["b2"]

    B, T = tokens.shape
    vocab, C = emb_table.shape
    W = block_size
    Kc = W * C
    H = w1.shape[1]
    Hp = _round_up(H, 128)      # TODO(synk): round to 256 on v6e/v7x (256x256 MXU)

    tb, Bp, Vt, Vp, vmem_cap = _choose_tiles(B, T, C, W, Hp, vocab)
    R = tb * T
    Mp = Bp * T
    num_m, num_v = Bp // tb, Vp // Vt

    # Embedding lookup stays in XLA (gather); bf16 halves the HBM bytes.
    # TODO(synk): for small tables, keep emb in VMEM and gather in-kernel.
    x = emb_table[tokens].astype(jnp.bfloat16)            # (B, T, C)
    if Bp != B:
        x = jnp.pad(x, ((0, Bp - B), (0, 0), (0, 0)))

    # Zero-padded Hp / Vp is exact (ReLU(0)=0, padded w2 rows are zero).
    w1p = jnp.pad(w1, ((0, 0), (0, Hp - H))).astype(jnp.bfloat16)        # (Kc, Hp)
    b1p = jnp.pad(b1.astype(jnp.float32), ((0, 0), (0, Hp - H)))          # (1, Hp)
    w2p = jnp.pad(w2, ((0, Hp - H), (0, Vp - vocab))).astype(jnp.bfloat16)
    b2p = jnp.pad(b2.astype(jnp.float32), ((0, 0), (0, Vp - vocab)))

    # Explicit VMEM budget from the real per-tile footprint (uses C, not 128).
    footprint = (2 * tb * T * C * 2 + 2 * R * Vt * 2       # x / logits tiles
                 + 2 * Kc * Hp * 2 + 2 * Hp * 4            # w1 / b1
                 + 2 * Hp * Vt * 2 + 2 * Vt * 4            # w2 / b2 tiles
                 + tb * T * Kc * 2 + R * Hp * 2)           # concat + hidden
    vmem_limit = int(min(max(2 * footprint, 8 << 20), int(vmem_cap * 0.9)))

    kernel = functools.partial(_ngram_mlp_kernel, W=W, C=C)
    out = pl.pallas_call(
        kernel,
        out_shape=jax.ShapeDtypeStruct((Mp, Vp), jnp.bfloat16),
        grid=(num_m, num_v),
        in_specs=[
            pl.BlockSpec((tb, T, C), lambda i, v: (i, 0, 0)),   # x rows
            pl.BlockSpec((Kc, Hp), lambda i, v: (0, 0)),        # w1 resident
            pl.BlockSpec((1, Hp), lambda i, v: (0, 0)),         # b1 resident
            pl.BlockSpec((Hp, Vt), lambda i, v: (0, v)),        # w2 V-tile
            pl.BlockSpec((1, Vt), lambda i, v: (0, v)),         # b2 V-tile
        ],
        out_specs=pl.BlockSpec((R, Vt), lambda i, v: (i, v)),
        scratch_shapes=[
            pltpu.VMEM((tb, T, Kc), jnp.bfloat16),   # concat n-gram slab
            pltpu.VMEM((R, Hp), jnp.bfloat16),       # hidden, reused over V
        ],
        compiler_params=pltpu.CompilerParams(
            dimension_semantics=("parallel", "arbitrary"),
            vmem_limit_bytes=vmem_limit),
    )(x, w1p, b1p, w2p, b2p)

    return out[:B * T, :vocab].reshape(B, T, vocab)


def ngram_forward_with_loss(tokens, params, block_size, target=None):
    # TODO(synk): fuse the cross-entropy row-max/sum-exp/label-gather into the
    # kernel so (B*T, V) logits never leave VMEM when target is provided.
    logits = ngram_forward(tokens, params, block_size)
    if target is None:
        return logits, None
    B, T, V = logits.shape
    logp = jax.nn.log_softmax(
        logits.reshape(B * T, V).astype(jnp.float32), axis=-1)
    tgt = target.reshape(B * T)
    loss = -jnp.mean(logp[jnp.arange(B * T), tgt])
    return logits, loss


# ---------------------- pure-JAX reference (for checking) ------------------ #
def _concat_windows(emb, window_size):
    """Mirror of NGramLanguageModel._get_concatenated_input."""
    B, T, C = emb.shape
    padded = jnp.pad(emb, ((0, 0), (window_size - 1, 0), (0, 0)))
    idx = jnp.arange(T)[:, None] + jnp.arange(window_size)[None, :]
    return padded[:, idx, :].reshape(B, T, window_size * C)


def _reference_logits(tokens, params, block_size):
    """Same math/quantization (bf16 inputs, f32 accumulation) in plain JAX."""
    emb = params["emb"][tokens].astype(jnp.bfloat16)
    B, T, C = emb.shape
    xcat = _concat_windows(emb, block_size).reshape(B * T, block_size * C)
    h = jnp.dot(xcat, params["w1"].astype(jnp.bfloat16),
                preferred_element_type=jnp.float32) + params["b1"]
    h = jnp.maximum(h, 0.0).astype(jnp.bfloat16)
    out = jnp.dot(h, params["w2"].astype(jnp.bfloat16),
                  preferred_element_type=jnp.float32) + params["b2"]
    return out.reshape(B, T, -1)


# ---------------------------------- main ----------------------------------- #
if __name__ == "__main__":
    # Small config consistent with the module's __init__.
    vocab_size = 128
    n_embed = 16
    block_size = 8          # window_size
    hidden = 32
    B, T = 2, block_size    # seq length = block_size, as in generate()

    key = jax.random.PRNGKey(0)
    k_emb, k_w1, k_b1, k_w2, k_b2, k_tok, k_tgt = jax.random.split(key, 7)

    D1 = block_size * n_embed
    params = {
        # nn.Embedding(vocab_size, n_embed)
        "emb": jax.random.normal(k_emb, (vocab_size, n_embed), jnp.float32) * 0.02,
        # nn.Linear(block_size*n_embed, hidden): weight stored input-major (D1, H)
        "w1": jax.random.normal(k_w1, (D1, hidden), jnp.float32) * 0.02,
        "b1": jax.random.normal(k_b1, (1, hidden), jnp.float32) * 0.02,
        # nn.Linear(hidden, vocab_size): weight stored input-major (H, V)
        "w2": jax.random.normal(k_w2, (hidden, vocab_size), jnp.float32) * 0.02,
        "b2": jax.random.normal(k_b2, (1, vocab_size), jnp.float32) * 0.02,
    }

    tokens = jax.random.randint(k_tok, (B, T), 0, vocab_size, dtype=jnp.int32)
    target = jax.random.randint(k_tgt, (B, T), 0, vocab_size, dtype=jnp.int32)

    logits, loss = ngram_forward_with_loss(tokens, params, block_size, target=None)
    logits = jax.block_until_ready(logits)
    assert logits.shape == (B, T, vocab_size)
    assert loss is None

    ref = _reference_logits(tokens, params, block_size)
    logits_f32 = logits.astype(jnp.float32)
    max_err = float(jnp.max(jnp.abs(logits_f32 - ref)))
    assert jnp.allclose(logits_f32, ref, atol=2e-3, rtol=3e-2), max_err

    # Exercise the loss path (plain-JAX glue around the same kernel).
    _, loss2 = ngram_forward_with_loss(tokens, params, block_size, target=target)
    loss2 = jax.block_until_ready(loss2)
    assert bool(jnp.isfinite(loss2))

    print("KERNEL_OK")
</pallas_src>

<mosaic_0001>
module attributes {stable_mosaic.version = 11 : i64} {
  func.func @_ngram_mlp_kernel(%arg0: i32, %arg1: i32, %arg2: memref<1x8x16xbf16, #tpu.memory_space<vmem>>, %arg3: memref<128x128xbf16, #tpu.memory_space<vmem>>, %arg4: memref<1x128xf32, #tpu.memory_space<vmem>>, %arg5: memref<128x128xbf16, #tpu.memory_space<vmem>>, %arg6: memref<1x128xf32, #tpu.memory_space<vmem>>, %arg7: memref<8x128xbf16, #tpu.memory_space<vmem>>, %arg8: memref<1x8x128xbf16, #tpu.memory_space<vmem>>, %arg9: memref<8x128xbf16, #tpu.memory_space<vmem>>) attributes {dimension_semantics = [#tpu.dimension_semantics<parallel>, #tpu.dimension_semantics<arbitrary>], iteration_bounds = array<i64: 2, 1>, scalar_prefetch = 0 : i64, scratch_operands = 2 : i64, tpu.core_type = #tpu.core_type<tc>, window_params = [{transform_indices = @transform_0, window_bounds = array<i64: 1, 8, 16>}, {pipeline_mode = #tpu.pipeline_mode<synchronous>, transform_indices = @transform_1, window_bounds = array<i64: 128, 128>}, {pipeline_mode = #tpu.pipeline_mode<synchronous>, transform_indices = @transform_2, window_bounds = array<i64: 1, 128>}, {transform_indices = @transform_3, window_bounds = array<i64: 128, 128>}, {transform_indices = @transform_4, window_bounds = array<i64: 1, 128>}, {transform_indices = @transform_5, window_bounds = array<i64: 8, 128>}]} {
    %c0_i32 = arith.constant 0 : i32
    %0 = arith.cmpi eq, %arg1, %c0_i32 : i32
    %1 = arith.extui %0 : i1 to i32
    %c0_i32_0 = arith.constant 0 : i32
    %2 = arith.cmpi ne, %1, %c0_i32_0 : i32
    scf.if %2 {
      %cst_8 = arith.constant 0.000000e+00 : bf16
      %11 = vector.broadcast %cst_8 : bf16 to vector<1x7x16xbf16>
      %c0_9 = arith.constant 0 : index
      %c0_10 = arith.constant 0 : index
      %c0_11 = arith.constant 0 : index
      %12 = vector.load %arg8[%c0_9, %c0_10, %c0_11] : memref<1x8x128xbf16, #tpu.memory_space<vmem>>, vector<1x7x16xbf16>
      tpu.vector_store %arg8[%c0_9, %c0_10, %c0_11], %11 {strides = array<i32>} : memref<1x8x128xbf16, #tpu.memory_space<vmem>>, vector<1x7x16xbf16>,
      %c0_12 = arith.constant 0 : index
      %c0_13 = arith.constant 0 : index
      %c0_14 = arith.constant 0 : index
      %13 = vector.load %arg2[%c0_12, %c0_13, %c0_14] : memref<1x8x16xbf16, #tpu.memory_space<vmem>>, vector<1x1x16xbf16>
      %c0_15 = arith.constant 0 : index
      %c7 = arith.constant 7 : index
      %c0_16 = arith.constant 0 : index
      %14 = vector.load %arg8[%c0_15, %c7, %c0_16] : memref<1x8x128xbf16, #tpu.memory_space<vmem>>, vector<1x1x16xbf16>
      tpu.vector_store %arg8[%c0_15, %c7, %c0_16], %13 {strides = array<i32>} : memref<1x8x128xbf16, #tpu.memory_space<vmem>>, vector<1x1x16xbf16>,
      %cst_17 = arith.constant 0.000000e+00 : bf16
      %15 = vector.broadcast %cst_17 : bf16 to vector<1x6x16xbf16>
      %c0_18 = arith.constant 0 : index
      %c0_19 = arith.constant 0 : index
      %c16 = arith.constant 16 : index
      %16 = vector.load %arg8[%c0_18, %c0_19, %c16] : memref<1x8x128xbf16, #tpu.memory_space<vmem>>, vector<1x6x16xbf16>
      tpu.vector_store %arg8[%c0_18, %c0_19, %c16], %15 {strides = array<i32>} : memref<1x8x128xbf16, #tpu.memory_space<vmem>>, vector<1x6x16xbf16>,
      %c0_20 = arith.constant 0 : index
      %c0_21 = arith.constant 0 : index
      %c0_22 = arith.constant 0 : index
      %17 = vector.load %arg2[%c0_20, %c0_21, %c0_22] : memref<1x8x16xbf16, #tpu.memory_space<vmem>>, vector<1x2x16xbf16>
      %c0_23 = arith.constant 0 : index
      %c6 = arith.constant 6 : index
      %c16_24 = arith.constant 16 : index
      %18 = vector.load %arg8[%c0_23, %c6, %c16_24] : memref<1x8x128xbf16, #tpu.memory_space<vmem>>, vector<1x2x16xbf16>
      tpu.vector_store %arg8[%c0_23, %c6, %c16_24], %17 {strides = array<i32>} : memref<1x8x128xbf16, #tpu.memory_space<vmem>>, vector<1x2x16xbf16>,
      %cst_25 = arith.constant 0.000000e+00 : bf16
      %19 = vector.broadcast %cst_25 : bf16 to vector<1x5x16xbf16>
      %c0_26 = arith.constant 0 : index
      %c0_27 = arith.constant 0 : index
      %c32 = arith.constant 32 : index
      %20 = vector.load %arg8[%c0_26, %c0_27, %c32] : memref<1x8x128xbf16, #tpu.memory_space<vmem>>, vector<1x5x16xbf16>
      tpu.vector_store %arg8[%c0_26, %c0_27, %c32], %19 {strides = array<i32>} : memref<1x8x128xbf16, #tpu.memory_space<vmem>>, vector<1x5x16xbf16>,
      %c0_28 = arith.constant 0 : index
      %c0_29 = arith.constant 0 : index
      %c0_30 = arith.constant 0 : index
      %21 = vector.load %arg2[%c0_28, %c0_29, %c0_30] : memref<1x8x16xbf16, #tpu.memory_space<vmem>>, vector<1x3x16xbf16>
      %c0_31 = arith.constant 0 : index
      %c5 = arith.constant 5 : index
      %c32_32 = arith.constant 32 : index
      %22 = vector.load %arg8[%c0_31, %c5, %c32_32] : memref<1x8x128xbf16, #tpu.memory_space<vmem>>, vector<1x3x16xbf16>
      tpu.vector_store %arg8[%c0_31, %c5, %c32_32], %21 {strides = array<i32>} : memref<1x8x128xbf16, #tpu.memory_space<vmem>>, vector<1x3x16xbf16>,
      %cst_33 = arith.constant 0.000000e+00 : bf16
      %23 = vector.broadcast %cst_33 : bf16 to vector<1x4x16xbf16>
      %c0_34 = arith.constant 0 : index
      %c0_35 = arith.constant 0 : index
      %c48 = arith.constant 48 : index
      %24 = vector.load %arg8[%c0_34, %c0_35, %c48] : memref<1x8x128xbf16, #tpu.memory_space<vmem>>, vector<1x4x16xbf16>
      tpu.vector_store %arg8[%c0_34, %c0_35, %c48], %23 {strides = array<i32>} : memref<1x8x128xbf16, #tpu.memory_space<vmem>>, vector<1x4x16xbf16>,
      %c0_36 = arith.constant 0 : index
      %c0_37 = arith.constant 0 : index
      %c0_38 = arith.constant 0 : index
      %25 = vector.load %arg2[%c0_36, %c0_37, %c0_38] : memref<1x8x16xbf16, #tpu.memory_space<vmem>>, vector<1x4x16xbf16>
      %c0_39 = arith.constant 0 : index
      %c4 = arith.constant 4 : index
      %c48_40 = arith.constant 48 : index
      %26 = vector.load %arg8[%c0_39, %c4, %c48_40] : memref<1x8x128xbf16, #tpu.memory_space<vmem>>, vector<1x4x16xbf16>
      tpu.vector_store %arg8[%c0_39, %c4, %c48_40], %25 {strides = array<i32>} : memref<1x8x128xbf16, #tpu.memory_space<vmem>>, vector<1x4x16xbf16>,
      %cst_41 = arith.constant 0.000000e+00 : bf16
      %27 = vector.broadcast %cst_41 : bf16 to vector<1x3x16xbf16>
      %c0_42 = arith.constant 0 : index
      %c0_43 = arith.constant 0 : index
      %c64 = arith.constant 64 : index
      %28 = vector.load %arg8[%c0_42, %c0_43, %c64] : memref<1x8x128xbf16, #tpu.memory_space<vmem>>, vector<1x3x16xbf16>
      tpu.vector_store %arg8[%c0_42, %c0_43, %c64], %27 {strides = array<i32>} : memref<1x8x128xbf16, #tpu.memory_space<vmem>>, vector<1x3x16xbf16>,
      %c0_44 = arith.constant 0 : index
      %c0_45 = arith.constant 0 : index
      %c0_46 = arith.constant 0 : index
      %29 = vector.load %arg2[%c0_44, %c0_45, %c0_46] : memref<1x8x16xbf16, #tpu.memory_space<vmem>>, vector<1x5x16xbf16>
      %c0_47 = arith.constant 0 : index
      %c3 = arith.constant 3 : index
      %c64_48 = arith.constant 64 : index
      %30 = vector.load %arg8[%c0_47, %c3, %c64_48] : memref<1x8x128xbf16, #tpu.memory_space<vmem>>, vector<1x5x16xbf16>
      tpu.vector_store %arg8[%c0_47, %c3, %c64_48], %29 {strides = array<i32>} : memref<1x8x128xbf16, #tpu.memory_space<vmem>>, vector<1x5x16xbf16>,
      %cst_49 = arith.constant 0.000000e+00 : bf16
      %31 = vector.broadcast %cst_49 : bf16 to vector<1x2x16xbf16>
      %c0_50 = arith.constant 0 : index
      %c0_51 = arith.constant 0 : index
      %c80 = arith.constant 80 : index
      %32 = vector.load %arg8[%c0_50, %c0_51, %c80] : memref<1x8x128xbf16, #tpu.memory_space<vmem>>, vector<1x2x16xbf16>
      tpu.vector_store %arg8[%c0_50, %c0_51, %c80], %31 {strides = array<i32>} : memref<1x8x128xbf16, #tpu.memory_space<vmem>>, vector<1x2x16xbf16>,
      %c0_52 = arith.constant 0 : index
      %c0_53 = arith.constant 0 : index
      %c0_54 = arith.constant 0 : index
      %33 = vector.load %arg2[%c0_52, %c0_53, %c0_54] : memref<1x8x16xbf16, #tpu.memory_space<vmem>>, vector<1x6x16xbf16>
      %c0_55 = arith.constant 0 : index
      %c2 = arith.constant 2 : index
      %c80_56 = arith.constant 80 : index
      %34 = vector.load %arg8[%c0_55, %c2, %c80_56] : memref<1x8x128xbf16, #tpu.memory_space<vmem>>, vector<1x6x16xbf16>
      tpu.vector_store %arg8[%c0_55, %c2, %c80_56], %33 {strides = array<i32>} : memref<1x8x128xbf16, #tpu.memory_space<vmem>>, vector<1x6x16xbf16>,
      %cst_57 = arith.constant 0.000000e+00 : bf16
      %35 = vector.broadcast %cst_57 : bf16 to vector<1x1x16xbf16>
      %c0_58 = arith.constant 0 : index
      %c0_59 = arith.constant 0 : index
      %c96 = arith.constant 96 : index
      %36 = vector.load %arg8[%c0_58, %c0_59, %c96] : memref<1x8x128xbf16, #tpu.memory_space<vmem>>, vector<1x1x16xbf16>
      tpu.vector_store %arg8[%c0_58, %c0_59, %c96], %35 {strides = array<i32>} : memref<1x8x128xbf16, #tpu.memory_space<vmem>>, vector<1x1x16xbf16>,
      %c0_60 = arith.constant 0 : index
      %c0_61 = arith.constant 0 : index
      %c0_62 = arith.constant 0 : index
      %37 = vector.load %arg2[%c0_60, %c0_61, %c0_62] : memref<1x8x16xbf16, #tpu.memory_space<vmem>>, vector<1x7x16xbf16>
      %c0_63 = arith.constant 0 : index
      %c1 = arith.constant 1 : index
      %c96_64 = arith.constant 96 : index
      %38 = vector.load %arg8[%c0_63, %c1, %c96_64] : memref<1x8x128xbf16, #tpu.memory_space<vmem>>, vector<1x7x16xbf16>
      tpu.vector_store %arg8[%c0_63, %c1, %c96_64], %37 {strides = array<i32>} : memref<1x8x128xbf16, #tpu.memory_space<vmem>>, vector<1x7x16xbf16>,
      %c0_65 = arith.constant 0 : index
      %c0_66 = arith.constant 0 : index
      %c0_67 = arith.constant 0 : index
      %39 = vector.load %arg2[%c0_65, %c0_66, %c0_67] : memref<1x8x16xbf16, #tpu.memory_space<vmem>>, vector<1x8x16xbf16>
      %c0_68 = arith.constant 0 : index
      %c0_69 = arith.constant 0 : index
      %c112 = arith.constant 112 : index
      %40 = vector.load %arg8[%c0_68, %c0_69, %c112] : memref<1x8x128xbf16, #tpu.memory_space<vmem>>, vector<1x8x16xbf16>
      tpu.vector_store %arg8[%c0_68, %c0_69, %c112], %39 {strides = array<i32>} : memref<1x8x128xbf16, #tpu.memory_space<vmem>>, vector<1x8x16xbf16>,
      %c0_70 = arith.constant 0 : index
      %c0_71 = arith.constant 0 : index
      %c0_72 = arith.constant 0 : index
      %41 = vector.load %arg8[%c0_70, %c0_71, %c0_72] : memref<1x8x128xbf16, #tpu.memory_space<vmem>>, vector<1x8x128xbf16>
      %42 = vector.shape_cast %41 : vector<1x8x128xbf16> to vector<8x128xbf16>
      %c0_73 = arith.constant 0 : index
      %c0_74 = arith.constant 0 : index
      %43 = vector.load %arg3[%c0_73, %c0_74] : memref<128x128xbf16, #tpu.memory_space<vmem>>, vector<128x128xbf16>
      %cst_75 = arith.constant dense<0.000000e+00> : vector<8x128xf32>
      %44 = tpu.matmul %42, %43, %cst_75 {dimension_numbers = #tpu.dot_dimension_numbers<[1], [0], [0], [1], [0, 0, 1, 1], [], []>} : vector<8x128xbf16>, vector<128x128xbf16>, vector<8x128xf32> -> vector<8x128xf32>
      %c0_76 = arith.constant 0 : index
      %c0_77 = arith.constant 0 : index
      %45 = vector.load %arg4[%c0_76, %c0_77] : memref<1x128xf32, #tpu.memory_space<vmem>>, vector<1x128xf32>
      %46 = vector.broadcast %45 : vector<1x128xf32> to vector<8x128xf32>
      %47 = arith.addf %44, %46 : vector<8x128xf32>
      %cst_78 = arith.constant 0.000000e+00 : f32
      %48 = vector.broadcast %cst_78 : f32 to vector<8x128xf32>
      %49 = arith.maximumf %47, %48 : vector<8x128xf32>
      %50 = arith.truncf %49 : vector<8x128xf32> to vector<8x128xbf16>
      %c0_79 = arith.constant 0 : index
      %c0_80 = arith.constant 0 : index
      %51 = vector.load %arg9[%c0_79, %c0_80] : memref<8x128xbf16, #tpu.memory_space<vmem>>, vector<8x128xbf16>
      tpu.vector_store %arg9[%c0_79, %c0_80], %50 {strides = array<i32>} : memref<8x128xbf16, #tpu.memory_space<vmem>>, vector<8x128xbf16>,
    } else {
    }
    %c0 = arith.constant 0 : index
    %c0_1 = arith.constant 0 : index
    %3 = vector.load %arg9[%c0, %c0_1] : memref<8x128xbf16, #tpu.memory_space<vmem>>, vector<8x128xbf16>
    %c0_2 = arith.constant 0 : index
    %c0_3 = arith.constant 0 : index
    %4 = vector.load %arg5[%c0_2, %c0_3] : memref<128x128xbf16, #tpu.memory_space<vmem>>, vector<128x128xbf16>
    %cst = arith.constant dense<0.000000e+00> : vector<8x128xf32>
    %5 = tpu.matmul %3, %4, %cst {dimension_numbers = #tpu.dot_dimension_numbers<[1], [0], [0], [1], [0, 0, 1, 1], [], []>} : vector<8x128xbf16>, vector<128x128xbf16>, vector<8x128xf32> -> vector<8x128xf32>
    %c0_4 = arith.constant 0 : index
    %c0_5 = arith.constant 0 : index
    %6 = vector.load %arg6[%c0_4, %c0_5] : memref<1x128xf32, #tpu.memory_space<vmem>>, vector<1x128xf32>
    %7 = vector.broadcast %6 : vector<1x128xf32> to vector<8x128xf32>
    %8 = arith.addf %5, %7 : vector<8x128xf32>
    %9 = arith.truncf %8 : vector<8x128xf32> to vector<8x128xbf16>
    %c0_6 = arith.constant 0 : index
    %c0_7 = arith.constant 0 : index
    %10 = vector.load %arg7[%c0_6, %c0_7] : memref<8x128xbf16, #tpu.memory_space<vmem>>, vector<8x128xbf16>
    tpu.vector_store %arg7[%c0_6, %c0_7], %9 {strides = array<i32>} : memref<8x128xbf16, #tpu.memory_space<vmem>>, vector<8x128xbf16>,
    return
  }
  func.func @transform_0(%arg0: i32, %arg1: i32) -> (i32, i32, i32) {
    %c0_i32 = arith.constant 0 : i32
    %c0_i32_0 = arith.constant 0 : i32
    %c0_i32_1 = arith.constant 0 : i32
    return %arg0, %c0_i32, %c0_i32_0 : i32, i32, i32
  }
  func.func @transform_1(%arg0: i32, %arg1: i32) -> (i32, i32) {
    %c0_i32 = arith.constant 0 : i32
    %c0_i32_0 = arith.constant 0 : i32
    %c0_i32_1 = arith.constant 0 : i32
    return %c0_i32, %c0_i32_0 : i32, i32
  }
  func.func @transform_2(%arg0: i32, %arg1: i32) -> (i32, i32) {
    %c0_i32 = arith.constant 0 : i32
    %c0_i32_0 = arith.constant 0 : i32
    %c0_i32_1 = arith.constant 0 : i32
    return %c0_i32, %c0_i32_0 : i32, i32
  }
  func.func @transform_3(%arg0: i32, %arg1: i32) -> (i32, i32) {
    %c0_i32 = arith.constant 0 : i32
    %c0_i32_0 = arith.constant 0 : i32
    return %c0_i32, %arg1 : i32, i32
  }
  func.func @transform_4(%arg0: i32, %arg1: i32) -> (i32, i32) {
    %c0_i32 = arith.constant 0 : i32
    %c0_i32_0 = arith.constant 0 : i32
    return %c0_i32, %arg1 : i32, i32
  }
  func.func @transform_5(%arg0: i32, %arg1: i32) -> (i32, i32) {
    %c0_i32 = arith.constant 0 : i32
    return %arg0, %arg1 : i32, i32
  }
}

</mosaic_0001>

<llo_original>
// kernel: ngram_forward.1
$region0: #{ngram_forward.1}
  #allocation0 [shape = 'u32[]', space=smem, size = 0x4, offset = 0x4, fixed_abs, tag = 'smem constant byte address 0x4 - core index']
  #allocation1 [shape = 'u32[144,128]{1,0:T(1,128)}', space=vmem, size = 0x12000, scoped, tag = 'internal scratch']
  #allocation2 [shape = 'bf16[1,8,128]{2,1,0:T(8,128)(2,1)}', space=vmem, size = 0x800, scoped, tag = 'scratch operand']
  #allocation3 [shape = 'bf16[8,128]{1,0:T(8,128)(2,1)}', space=vmem, size = 0x800, scoped, tag = 'scratch operand']
  %s0 = inlined_call_operand.vmem [shape: bf16[2,8,16], index: 0, kind: input, shape index: {}]
  %s1 = inlined_call_operand.vmem [shape: bf16[128,128], index: 1, kind: input, shape index: {}]
  %s2 = inlined_call_operand.vmem [shape: f32[1,128], index: 2, kind: input, shape index: {}]
  %s3 = inlined_call_operand.vmem [shape: bf16[128,128], index: 3, kind: input, shape index: {}]
  %s4 = inlined_call_operand.vmem [shape: f32[1,128], index: 4, kind: input, shape index: {}]
  %s5 = inlined_call_operand.hbm [shape: bf16[16,128], index: 5, kind: output, shape index: {}]
  %s6 = sld [smem:[#allocation0]]
  $region57: #{ngram_forward.1} parent=0
    _
  %s8 = ssub.s32 1, %s6
  %s9 = scalar_select 0, %s8, %s6
  $region1: #{ngram_forward.1} parent=0
    #allocation4 [shape = 'u8[4096]{0}', space=vmem, size = 0x1000, scoped, tag = 'output window, operand 0']
    #allocation5 [shape = 's32[2]{0}', space=sflag, size = 0x8, scoped, tag = 'scoped memory for ngram_forward.1']
    %10 = vsyncpa [#allocation5], 0
    %s11 = scalar_lea.sflag [#allocation5], 1
    %12 = vsyncpa %s11, 0
    loop: start=0, step=1, limit=4
    $region2: #{ngram_forward.1} parent=1 // loop_pre_header
      _
    $region3: #{ngram_forward.1} parent=1 // loop_header
      %s14 = sphi 0, %s18
      %p15 = scmp.ge.s32.totalorder %s14, 4
      %s21 = sphi 0, %s33
      %s22 = sphi 0, %s29
      %s23 = sphi 0, %s21
      %s24 = sphi 0, %s22
      %s25 = sphi 0, %s23
      %s26 = sphi 0, %s24
      %s36 = sphi 0, %s38
      %s39 = sphi 0, %s36
      %s40 = sphi 0, %s39
      %s56 = sphi 0, %s40
      %s60 = sphi 0, %s60
      %s62 = sphi 0, %s60
      %s63 = sphi 0, %s62
      %s77 = sphi 0, %s63
      %s81 = sphi 0, %s81
      %s83 = sphi 0, %s81
      %s84 = sphi 0, %s83
      %s98 = sphi 0, %s84
      %s104 = sphi 0, %s106
      %s107 = sphi 0, %s104
      %s108 = sphi 0, %s107
      %s124 = sphi 0, %s108
      %s130 = sphi 0, %s132
      %s133 = sphi 0, %s130
      %s134 = sphi 0, %s133
      %s150 = sphi 0, %s134
      %s158 = sphi 0, %s160
      %s161 = sphi 0, %s158
      %s162 = sphi 0, %s161
      %s178 = sphi 0, %s162
    $region4: #{ngram_forward.1} parent=1 // loop_header_branch
      %17 = sbr.rel (%p15) target = $region8
    $region5: #{ngram_forward.1} parent=1 // loop_body
      %s19 = ssub.s32 %s14, 1
      %s20 = ssub.s32 %s14, 2
      %s27 = sadd.s32 1, %s22
      %p28 = scmp.ge.s32.totalorder %s27, 1
      %s29 = scalar_select %p28, 0, %s27
      %s30 = sadd.s32 1, %s21
      %s31 = scalar_select %p28, %s30, %s21
      %p32 = scmp.ge.s32.totalorder %s31, 2
      %s33 = scalar_select %p32, 0, %s31
      %s34 = ssub.s32 %s21, %s33
      %p35 = scmp.eq.s32.totalorder %s34, 0
      %s37 = sadd.s32 %s36, 1
      %s38 = scalar_select %p35, %s36, %s37
      %p41 = pneg %p35
      %p42 = scmp.eq.s32.totalorder %s14, 1
      %p43 = por %p41, %p42
      %p44 = scmp.ne.s32.totalorder %s36, %s39
      %p45 = scmp.eq.s32.totalorder %s14, 0
      %p46 = por %p44, %p45
      %p47 = scmp.ne.s32.totalorder %s36, %s39
      %p48 = scmp.eq.s32.totalorder %s19, 1
      %p49 = por %p47, %p48
      %p50 = scmp.ne.s32.totalorder %s39, %s40
      %p51 = scmp.eq.s32.totalorder %s19, 0
      %p52 = por %p50, %p51
      %p53 = scmp.ne.s32.totalorder %s39, %s40
      %p54 = scmp.eq.s32.totalorder %s20, 1
      %p55 = por %p53, %p54
      %p57 = scmp.ne.s32.totalorder %s40, %s56
      %p58 = scmp.eq.s32.totalorder %s20, 0
      %p59 = por %p57, %p58
      %s61 = sadd.s32 %s60, 1
      %p64 = scmp.eq.s32.totalorder %s14, 1
      %p65 = scmp.ne.s32.totalorder %s60, %s62
      %p66 = scmp.eq.s32.totalorder %s14, 0
      %p67 = por %p65, %p66
      %p68 = scmp.ne.s32.totalorder %s60, %s62
      %p69 = scmp.eq.s32.totalorder %s19, 1
      %p70 = por %p68, %p69
      %p71 = scmp.ne.s32.totalorder %s62, %s63
      %p72 = scmp.eq.s32.totalorder %s19, 0
      %p73 = por %p71, %p72
      %p74 = scmp.ne.s32.totalorder %s62, %s63
      %p75 = scmp.eq.s32.totalorder %s20, 1
      %p76 = por %p74, %p75
      %p78 = scmp.ne.s32.totalorder %s63, %s77
      %p79 = scmp.eq.s32.totalorder %s20, 0
      %p80 = por %p78, %p79
      %s82 = sadd.s32 %s81, 1
      %p85 = scmp.eq.s32.totalorder %s14, 1
      %p86 = scmp.ne.s32.totalorder %s81, %s83
      %p87 = scmp.eq.s32.totalorder %s14, 0
      %p88 = por %p86, %p87
      %p89 = scmp.ne.s32.totalorder %s81, %s83
      %p90 = scmp.eq.s32.totalorder %s19, 1
      %p91 = por %p89, %p90
      %p92 = scmp.ne.s32.totalorder %s83, %s84
      %p93 = scmp.eq.s32.totalorder %s19, 0
      %p94 = por %p92, %p93
      %p95 = scmp.ne.s32.totalorder %s83, %s84
      %p96 = scmp.eq.s32.totalorder %s20, 1
      %p97 = por %p95, %p96
      %p99 = scmp.ne.s32.totalorder %s84, %s98
      %p100 = scmp.eq.s32.totalorder %s20, 0
      %p101 = por %p99, %p100
      %s102 = ssub.s32 %s22, %s29
      %p103 = scmp.eq.s32.totalorder %s102, 0
      %s105 = sadd.s32 %s104, 1
      %s106 = scalar_select %p103, %s104, %s105
      %p109 = pneg %p103
      %p110 = scmp.eq.s32.totalorder %s14, 1
      %p111 = por %p109, %p110
      %p112 = scmp.ne.s32.totalorder %s104, %s107
      %p113 = scmp.eq.s32.totalorder %s14, 0
      %p114 = por %p112, %p113
      %p115 = scmp.ne.s32.totalorder %s104, %s107
      %p116 = scmp.eq.s32.totalorder %s19, 1
      %p117 = por %p115, %p116
      %p118 = scmp.ne.s32.totalorder %s107, %s108
      %p119 = scmp.eq.s32.totalorder %s19, 0
      %p120 = por %p118, %p119
      %p121 = scmp.ne.s32.totalorder %s107, %s108
      %p122 = scmp.eq.s32.totalorder %s20, 1
      %p123 = por %p121, %p122
      %p125 = scmp.ne.s32.totalorder %s108, %s124
      %p126 = scmp.eq.s32.totalorder %s20, 0
      %p127 = por %p125, %p126
      %s128 = ssub.s32 %s22, %s29
      %p129 = scmp.eq.s32.totalorder %s128, 0
      %s131 = sadd.s32 %s130, 1
      %s132 = scalar_select %p129, %s130, %s131
      %p135 = pneg %p129
      %p136 = scmp.eq.s32.totalorder %s14, 1
      %p137 = por %p135, %p136
      %p138 = scmp.ne.s32.totalorder %s130, %s133
      %p139 = scmp.eq.s32.totalorder %s14, 0
      %p140 = por %p138, %p139
      %p141 = scmp.ne.s32.totalorder %s130, %s133
      %p142 = scmp.eq.s32.totalorder %s19, 1
      %p143 = por %p141, %p142
      %p144 = scmp.ne.s32.totalorder %s133, %s134
      %p145 = scmp.eq.s32.totalorder %s19, 0
      %p146 = por %p144, %p145
      %p147 = scmp.ne.s32.totalorder %s133, %s134
      %p148 = scmp.eq.s32.totalorder %s20, 1
      %p149 = por %p147, %p148
      %p151 = scmp.ne.s32.totalorder %s134, %s150
      %p152 = scmp.eq.s32.totalorder %s20, 0
      %p153 = por %p151, %p152
      %s154 = ssub.s32 %s21, %s33
      %s155 = ssub.s32 %s22, %s29
      %s156 = sor.u32 %s154, %s155
      %p157 = scmp.eq.s32.totalorder %s156, 0
      %s159 = sadd.s32 %s158, 1
      %s160 = scalar_select %p157, %s158, %s159
      %p163 = pneg %p157
      %p164 = scmp.eq.s32.totalorder %s14, 1
      %p165 = por %p163, %p164
      %p166 = scmp.ne.s32.totalorder %s158, %s161
      %p167 = scmp.eq.s32.totalorder %s14, 0
      %p168 = por %p166, %p167
      %p169 = scmp.ne.s32.totalorder %s158, %s161
      %p170 = scmp.eq.s32.totalorder %s19, 1
      %p171 = por %p169, %p170
      %p172 = scmp.ne.s32.totalorder %s161, %s162
      %p173 = scmp.eq.s32.totalorder %s19, 0
      %p174 = por %p172, %p173
      %p175 = scmp.ne.s32.totalorder %s161, %s162
      %p176 = scmp.eq.s32.totalorder %s20, 1
      %p177 = por %p175, %p176
      %p179 = scmp.ne.s32.totalorder %s162, %s178
      %p180 = scmp.eq.s32.totalorder %s20, 0
      %p181 = por %p179, %p180
      %p182 = scmp.le.s32.totalorder 1, %s14
      %p183 = scmp.lt.s32.totalorder %s14, 3
      %p184 = pnand %p182, %p183
      %p185 = pneg %p184
      // Predicated region
      $region9: #{ngram_forward.1} parent=5 // pred_check
        _
      $region10: #{ngram_forward.1} parent=5 // pred_check_branch
        %187 = sbr.rel (%p184) target = $region12
      $region11: #{ngram_forward.1} parent=5 // pred_region
        %s188 = ssub.s32 %s14, 1
        // Predicated region
        $region13: #{ngram_forward.1} parent=11 // pred_check
          %p189 = pneg %p73
        $region14: #{ngram_forward.1} parent=11 // pred_check_branch
          %191 = sbr.rel (%p189) target = $region16
        $region15: #{ngram_forward.1} parent=11 // pred_region
          _
        $region16: #{ngram_forward.1} parent=11 // pred_fallthru
          _
        // Predicated region
        $region17: #{ngram_forward.1} parent=11 // pred_check
          %p192 = pneg %p94
        $region18: #{ngram_forward.1} parent=11 // pred_check_branch
          %194 = sbr.rel (%p192) target = $region20
        $region19: #{ngram_forward.1} parent=11 // pred_region
          _
        $region20: #{ngram_forward.1} parent=11 // pred_fallthru
          _
        // Predicated region
        $region21: #{ngram_forward.1} parent=11 // pred_check
          %p195 = pneg %p120
        $region22: #{ngram_forward.1} parent=11 // pred_check_branch
          %197 = sbr.rel (%p195) target = $region24
        $region23: #{ngram_forward.1} parent=11 // pred_region
          %p198 = scmp.lt.s32.totalorder %s24, 0
          %s199 = scalar_select %p198, %s24, 0
          %s200 = smul.addr %s199, 4
          %s201 = scalar_lea.vmem %s3, %s200
        $region24: #{ngram_forward.1} parent=11 // pred_fallthru
          _
        // Predicated region
        $region25: #{ngram_forward.1} parent=11 // pred_check
          %p202 = pneg %p146
        $region26: #{ngram_forward.1} parent=11 // pred_check_branch
          %204 = sbr.rel (%p202) target = $region28
        $region27: #{ngram_forward.1} parent=11 // pred_region
          %p205 = scmp.lt.s32.totalorder %s24, 0
          %s206 = scalar_select %p205, %s24, 0
          %s207 = scalar_lea.vmem %s4, %s206
        $region28: #{ngram_forward.1} parent=11 // pred_fallthru
          _
      $region12: #{ngram_forward.1} parent=5 // pred_fallthru
        _
      %p208 = scmp.lt.s32.totalorder %s14, 2
      // Predicated region
      $region29: #{ngram_forward.1} parent=5 // pred_check
        %p209 = pneg %p208
      $region30: #{ngram_forward.1} parent=5 // pred_check_branch
        %211 = sbr.rel (%p209) target = $region32
      $region31: #{ngram_forward.1} parent=5 // pred_region
        // Predicated region
        $region33: #{ngram_forward.1} parent=31 // pred_check
          %p212 = pneg %p46
        $region34: #{ngram_forward.1} parent=31 // pred_check_branch
          %214 = sbr.rel (%p212) target = $region36
        $region35: #{ngram_forward.1} parent=31 // pred_region
          %p215 = scmp.lt.s32.totalorder %s21, 1
          %s216 = scalar_select %p215, %s21, 1
          %s217 = smul.addr %s216, 4
          %s218 = scalar_lea.vmem %s0, %s217
        $region36: #{ngram_forward.1} parent=31 // pred_fallthru
          _
      $region32: #{ngram_forward.1} parent=5 // pred_fallthru
        _
      %p219 = scmp.le.s32.totalorder 1, %s14
      %p220 = scmp.lt.s32.totalorder %s14, 3
      %p221 = pnand %p219, %p220
      %p222 = pneg %p221
      // Predicated region
      $region37: #{ngram_forward.1} parent=5 // pred_check
        _
      $region38: #{ngram_forward.1} parent=5 // pred_check_branch
        %224 = sbr.rel (%p221) target = $region40
      $region39: #{ngram_forward.1} parent=5 // pred_region
        %s225 = ssub.s32 %s14, 1
        %p226 = scmp.lt.s32.totalorder %s23, 1
        %s227 = scalar_select %p226, %s23, 1
        %s228 = smul.addr %s227, 4
        %s229 = scalar_lea.vmem %s0, %s228
        %p230 = pneg %p52
        %p231 = pneg %p49
        %p232 = pneg %p73
        %p233 = pneg %p70
        %p234 = pneg %p94
        %p235 = pneg %p91
        %p236 = scmp.lt.s32.totalorder %s24, 0
        %s237 = scalar_select %p236, %s24, 0
        %s238 = smul.addr %s237, 4
        %s239 = scalar_lea.vmem %s3, %s238
        %p240 = pneg %p120
        %p241 = pneg %p117
        %p242 = scmp.lt.s32.totalorder %s24, 0
        %s243 = scalar_select %p242, %s24, 0
        %s244 = scalar_lea.vmem %s4, %s243
        %p245 = pneg %p146
        %p246 = pneg %p143
        %p247 = pneg %p174
        %p248 = pneg %p171
        %s249 = sand.u32 %s161, 1
        %s250 = scalar_lea.sflag [#allocation5], %s249
        %s251 = sand.u32 %s161, 1
        %s252 = smul.addr %s251, 4
        %s253 = scalar_lea.vmem [#allocation4], %s252
        %p254 = scmp.lt.s32.totalorder %s23, 1
        %s255 = scalar_select %p254, %s23, 1
        %s256 = smul.addr %s255, 4
        %s257 = scalar_lea.vmem %s0, %s256
        %p258 = scmp.lt.s32.totalorder %s24, 0
        %s259 = scalar_select %p258, %s24, 0
        %s260 = smul.addr %s259, 4
        %s261 = scalar_lea.vmem %s3, %s260
        %p262 = scmp.lt.s32.totalorder %s24, 0
        %s263 = scalar_select %p262, %s24, 0
        %s264 = scalar_lea.vmem %s4, %s263
        %p266 = scmp.eq.s32.totalorder %s24, 0
        // Predicated region
        $region41: #{ngram_forward.1} parent=39 // pred_check
          %p267 = pneg %p266
        $region42: #{ngram_forward.1} parent=39 // pred_check_branch
          %269 = sbr.rel (%p267) target = $region44
        $region43: #{ngram_forward.1} parent=39 // pred_region
          %vm270 = vcmask 125952
          %vm271 = vsmask.f32 3328
          %vm272 = vmand %vm270, %vm271
          %v273 = vld [vmem:[#allocation2] sm:$0xf]
          %v274 = vsel %vm272, 0, %v273
          %275 = vst [vmem:[#allocation2] sm:$0xf] %v274
          %v276 = vld [vmem:[%s257] sm:$0x1]
          %v278 = vshll.u32 %v276, 16
          %v280 = vrot.slane %v278, 5
          %vm282 = vcmask 125955
          %vm283 = vsmask.f32 7950
          %vm284 = vmand %vm282, %vm283
          %v285 = vld [vmem:[#allocation2] sm:$0x8]
          %v286 = vsel %vm284, %v280, %v285
          %287 = vst [vmem:[#allocation2] sm:$0x8] %v286
          %vm288 = vcmask 256128
          %289 = vst.msk [vmem:[#allocation2] sm:$0x7] %vm288, 0
          %v290 = vld [vmem:[%s257] sm:$0x1]
          %v292 = vrot.slane %v290, 5
          %293 = vrot.lane.b32.xlu0 %v292, 16
          %v294 = vpop.permute.xlu0 %293
          %vm296 = vcmask 257155
          %297 = vst.msk [vmem:[#allocation2] sm:$0x8] %vm296, %v294
          %vm298 = vcmask 387328
          %vm299 = vsmask.f32 2304
          %vm300 = vmand %vm298, %vm299
          %v301 = vld [vmem:[#allocation2] sm:$0x7]
          %v302 = vsel %vm300, 0, %v301
          %303 = vst [vmem:[#allocation2] sm:$0x7] %v302
          %v304 = vld [vmem:[%s257] sm:$0x3]
          %v306 = vshrl.u32 %v304, 16
          %v308 = vrot.slane %v306, 5
          %v309 = vshll.u32 %v304, 16
          %v311 = vrot.slane %v309, 6
          %v312 = vor.u32 %v308, %v311
          %313 = vrot.lane.b32.xlu0 %v312, 32
          %v314 = vpop.permute.xlu0 %313
          %vm316 = vcmask 388354
          %vm317 = vsmask.f32 7946
          %vm318 = vmand %vm316, %vm317
          %v319 = vld [vmem:[#allocation2] sm:$0xc]
          %v320 = vsel %vm318, %v314, %v319
          %321 = vst [vmem:[#allocation2] sm:$0xc] %v320
          %vm322 = vcmask 517504
          %323 = vst.msk [vmem:[#allocation2] sm:$0x3] %vm322, 0
          %v324 = vld [vmem:[%s257] sm:$0x3]
          %v326 = vrot.slane %v324, 6
          %327 = vrot.lane.b32.xlu0 %v326, 48
          %v328 = vpop.permute.xlu0 %327
          %vm330 = vcmask 519554
          %331 = vst.msk [vmem:[#allocation2] sm:$0xc] %vm330, %v328
          %vm332 = vcmask 648704
          %vm333 = vsmask.f32 1280
          %vm334 = vmand %vm332, %vm333
          %v335 = vld [vmem:[#allocation2] sm:$0x3]
          %v336 = vsel %vm334, 0, %v335
          %337 = vst [vmem:[#allocation2] sm:$0x3] %v336
          %v338 = vld [vmem:[%s257] sm:$0x7]
          %v340 = vshrl.u32 %v338, 16
          %v342 = vrot.slane %v340, 6
          %v343 = vshll.u32 %v338, 16
          %v345 = vrot.slane %v343, 7
          %v346 = vor.u32 %v342, %v345
          %347 = vrot.lane.b32.xlu0 %v346, 64
          %v348 = vpop.permute.xlu0 %347
          %vm350 = vcmask 650753
          %vm351 = vsmask.f32 7942
          %vm352 = vmand %vm350, %vm351
          %v353 = vld [vmem:[#allocation2] sm:$0xe]
          %v354 = vsel %vm352, %v348, %v353
          %355 = vst [vmem:[#allocation2] sm:$0xe] %v354
          %vm356 = vcmask 778880
          %357 = vst.msk [vmem:[#allocation2] sm:$0x1] %vm356, 0
          %v358 = vld [vmem:[%s257] sm:$0x7]
          %v360 = vrot.slane %v358, 7
          %361 = vrot.lane.b32.xlu0 %v360, 80
          %v362 = vpop.permute.xlu0 %361
          %vm364 = vcmask 781953
          %365 = vst.msk [vmem:[#allocation2] sm:$0xe] %vm364, %v362
          %vm366 = vcmask 910080
          %vm367 = vsmask.f32 256
          %vm368 = vmand %vm366, %vm367
          %v369 = vld [vmem:[#allocation2] sm:$0x1]
          %v370 = vsel %vm368, 0, %v369
          %371 = vst [vmem:[#allocation2] sm:$0x1] %v370
          %v372 = vld [vmem:[%s257] sm:$0xf]
          %v374 = vshrl.u32 %v372, 16
          %v376 = vrot.slane %v374, 7
          %v377 = vshll.u32 %v372, 16
          %v379 = vor.u32 %v376, %v377
          %380 = vrot.lane.b32.xlu0 %v379, 96
          %v381 = vpop.permute.xlu0 %380
          %vm383 = vcmask 913152
          %vm384 = vsmask.f32 7938
          %vm385 = vmand %vm383, %vm384
          %v386 = vld [vmem:[#allocation2] sm:$0xf]
          %v387 = vsel %vm385, %v381, %v386
          %388 = vst [vmem:[#allocation2] sm:$0xf] %v387
          %v389 = vld [vmem:[%s257] sm:$0xf]
          %391 = vrot.lane.b32.xlu0 %v389, 112
          %v392 = vpop.permute.xlu0 %391
          %vm394 = vcmask 1044352
          %395 = vst.msk [vmem:[#allocation2] sm:$0xf] %vm394, %v392
          %v396 = vld [vmem:[#allocation2] sm:$0xf]
          %v397 = vld [vmem:[%s1] sm:$0xf]
          %v398 = vld [vmem:[%s1 + $0x4] sm:$0xf]
          %v399 = vld [vmem:[%s1 + $0x8] sm:$0xf]
          %v400 = vld [vmem:[%s1 + $0xc] sm:$0xf]
          %v401 = vld [vmem:[%s1 + $0x10] sm:$0xf]
          %v402 = vld [vmem:[%s1 + $0x14] sm:$0xf]
          %v403 = vld [vmem:[%s1 + $0x18] sm:$0xf]
          %v404 = vld [vmem:[%s1 + $0x1c] sm:$0xf]
          %v405 = vld [vmem:[%s1 + $0x20] sm:$0xf]
          %v406 = vld [vmem:[%s1 + $0x24] sm:$0xf]
          %v407 = vld [vmem:[%s1 + $0x28] sm:$0xf]
          %v408 = vld [vmem:[%s1 + $0x2c] sm:$0xf]
          %v409 = vld [vmem:[%s1 + $0x30] sm:$0xf]
          %v410 = vld [vmem:[%s1 + $0x34] sm:$0xf]
          %v411 = vld [vmem:[%s1 + $0x38] sm:$0xf]
          %v412 = vld [vmem:[%s1 + $0x3c] sm:$0xf]
          %v413 = vld [vmem:[%s2] sm:$0x1]
          %v415 = vlaneseq
          %v416 = vshrl.u32 %v415, 7
          %v417 = vsub.s32 0, %v416
          %v418 = vrot.slane %v413, %v417
          %v436 = vunpack.c.l.b16 %v397
          %v437 = vunpack.c.l.b16 %v398
          %v438 = vunpack.c.l.b16 %v399
          %v439 = vunpack.c.l.b16 %v400
          %v440 = vunpack.c.l.b16 %v401
          %v441 = vunpack.c.l.b16 %v402
          %v442 = vunpack.c.l.b16 %v403
          %v443 = vunpack.c.l.b16 %v404
          %v444 = vunpack.c.l.b16 %v405
          %v445 = vunpack.c.l.b16 %v406
          %v446 = vunpack.c.l.b16 %v407
          %v447 = vunpack.c.l.b16 %v408
          %v448 = vunpack.c.l.b16 %v409
          %v449 = vunpack.c.l.b16 %v410
          %v450 = vunpack.c.l.b16 %v411
          %v451 = vunpack.c.l.b16 %v412
          %v452 = vpack.c.b16 %v437, %v436
          %v453 = vpack.c.b16 %v439, %v438
          %v454 = vpack.c.b16 %v441, %v440
          %v455 = vpack.c.b16 %v443, %v442
          %v456 = vpack.c.b16 %v445, %v444
          %v457 = vpack.c.b16 %v447, %v446
          %v458 = vpack.c.b16 %v449, %v448
          %v459 = vpack.c.b16 %v451, %v450
          %468 = vmatprep.subr.bf16.mxu0 0
          %469 = vmatpush1.bf16.msra.mxu0 %v452
          %470 = vmatprep.subr.bf16.mxu0 0
          %471 = vmatpush1.bf16.msra.mxu0 %v453
          %472 = vmatprep.subr.bf16.mxu0 0
          %473 = vmatpush1.bf16.msra.mxu0 %v454
          %474 = vmatprep.subr.bf16.mxu0 0
          %475 = vmatpush1.bf16.msra.mxu0 %v455
          %476 = vmatprep.subr.bf16.mxu0 0
          %477 = vmatpush1.bf16.msra.mxu0 %v456
          %478 = vmatprep.subr.bf16.mxu0 0
          %479 = vmatpush1.bf16.msra.mxu0 %v457
          %480 = vmatprep.subr.bf16.mxu0 0
          %481 = vmatpush1.bf16.msra.mxu0 %v458
          %482 = vmatprep.subr.bf16.mxu0 0
          %483 = vmatpush1.bf16.msra.mxu0 %v459
          %484 = vmatprep.subr.bf16.mxu0 0
          %485 = vmatpush1.bf16.msra.mxu0 0
          %486 = vmatprep.subr.bf16.mxu0 0
          %487 = vmatpush1.bf16.msra.mxu0 0
          %488 = vmatprep.subr.bf16.mxu0 0
          %489 = vmatpush1.bf16.msra.mxu0 0
          %490 = vmatprep.subr.bf16.mxu0 0
          %491 = vmatpush1.bf16.msra.mxu0 0
          %492 = vmatprep.subr.bf16.mxu0 0
          %493 = vmatpush1.bf16.msra.mxu0 0
          %494 = vmatprep.subr.bf16.mxu0 0
          %495 = vmatpush1.bf16.msra.mxu0 0
          %496 = vmatprep.subr.bf16.mxu0 0
          %497 = vmatpush1.bf16.msra.mxu0 0
          %498 = vmatprep.subr.bf16.mxu0 0
          %499 = vmatpush1.bf16.msra.mxu0 0
          %500 = vmatprep.mubr.bf16.mxu0 0
          %501 = vmatmul.mubr.bf16.gmra.mrb[0].mxu0 %v396
          %v502 = vpop.f32.mrb[0].mxu0
          %v503 = vadd.f32 %v418, %v502
          %v504 = vpop.f32.mrb[0].mxu0
          %v505 = vpop.f32.mrb[0].mxu0
          %v506 = vpop.f32.mrb[0].mxu0
          %507 = vdwg.mxu0
          %v508 = vmax.f32 %v503, 0.0
          %v509 = vpack.c.bf16 %v508, %v508
          %510 = vst [vmem:[#allocation3] sm:$0xf] %v509
        $region44: #{ngram_forward.1} parent=39 // pred_fallthru
          _
        %v511 = vld [vmem:[#allocation3] sm:$0xf]
        %v512 = vld [vmem:[%s261] sm:$0xf]
        %v513 = vld [vmem:[%s261 + $0x4] sm:$0xf]
        %v514 = vld [vmem:[%s261 + $0x8] sm:$0xf]
        %v515 = vld [vmem:[%s261 + $0xc] sm:$0xf]
        %v516 = vld [vmem:[%s261 + $0x10] sm:$0xf]
        %v517 = vld [vmem:[%s261 + $0x14] sm:$0xf]
        %v518 = vld [vmem:[%s261 + $0x18] sm:$0xf]
        %v519 = vld [vmem:[%s261 + $0x1c] sm:$0xf]
        %v520 = vld [vmem:[%s261 + $0x20] sm:$0xf]
        %v521 = vld [vmem:[%s261 + $0x24] sm:$0xf]
        %v522 = vld [vmem:[%s261 + $0x28] sm:$0xf]
        %v523 = vld [vmem:[%s261 + $0x2c] sm:$0xf]
        %v524 = vld [vmem:[%s261 + $0x30] sm:$0xf]
        %v525 = vld [vmem:[%s261 + $0x34] sm:$0xf]
        %v526 = vld [vmem:[%s261 + $0x38] sm:$0xf]
        %v527 = vld [vmem:[%s261 + $0x3c] sm:$0xf]
        %v528 = vld [vmem:[%s264] sm:$0x1]
        %v530 = vlaneseq
        %v531 = vshrl.u32 %v530, 7
        %v532 = vsub.s32 0, %v531
        %v533 = vrot.slane %v528, %v532
        %v551 = vunpack.c.l.b16 %v512
        %v552 = vunpack.c.l.b16 %v513
        %v553 = vunpack.c.l.b16 %v514
        %v554 = vunpack.c.l.b16 %v515
        %v555 = vunpack.c.l.b16 %v516
        %v556 = vunpack.c.l.b16 %v517
        %v557 = vunpack.c.l.b16 %v518
        %v558 = vunpack.c.l.b16 %v519
        %v559 = vunpack.c.l.b16 %v520
        %v560 = vunpack.c.l.b16 %v521
        %v561 = vunpack.c.l.b16 %v522
        %v562 = vunpack.c.l.b16 %v523
        %v563 = vunpack.c.l.b16 %v524
        %v564 = vunpack.c.l.b16 %v525
        %v565 = vunpack.c.l.b16 %v526
        %v566 = vunpack.c.l.b16 %v527
        %v567 = vpack.c.b16 %v552, %v551
        %v568 = vpack.c.b16 %v554, %v553
        %v569 = vpack.c.b16 %v556, %v555
        %v570 = vpack.c.b16 %v558, %v557
        %v571 = vpack.c.b16 %v560, %v559
        %v572 = vpack.c.b16 %v562, %v561
        %v573 = vpack.c.b16 %v564, %v563
        %v574 = vpack.c.b16 %v566, %v565
        %583 = vmatprep.subr.bf16.mxu0 0
        %584 = vmatpush1.bf16.msra.mxu0 %v567
        %585 = vmatprep.subr.bf16.mxu0 0
        %586 = vmatpush1.bf16.msra.mxu0 %v568
        %587 = vmatprep.subr.bf16.mxu0 0
        %588 = vmatpush1.bf16.msra.mxu0 %v569
        %589 = vmatprep.subr.bf16.mxu0 0
        %590 = vmatpush1.bf16.msra.mxu0 %v570
        %591 = vmatprep.subr.bf16.mxu0 0
        %592 = vmatpush1.bf16.msra.mxu0 %v571
        %593 = vmatprep.subr.bf16.mxu0 0
        %594 = vmatpush1.bf16.msra.mxu0 %v572
        %595 = vmatprep.subr.bf16.mxu0 0
        %596 = vmatpush1.bf16.msra.mxu0 %v573
        %597 = vmatprep.subr.bf16.mxu0 0
        %598 = vmatpush1.bf16.msra.mxu0 %v574
        %599 = vmatprep.subr.bf16.mxu0 0
        %600 = vmatpush1.bf16.msra.mxu0 0
        %601 = vmatprep.subr.bf16.mxu0 0
        %602 = vmatpush1.bf16.msra.mxu0 0
        %603 = vmatprep.subr.bf16.mxu0 0
        %604 = vmatpush1.bf16.msra.mxu0 0
        %605 = vmatprep.subr.bf16.mxu0 0
        %606 = vmatpush1.bf16.msra.mxu0 0
        %607 = vmatprep.subr.bf16.mxu0 0
        %608 = vmatpush1.bf16.msra.mxu0 0
        %609 = vmatprep.subr.bf16.mxu0 0
        %610 = vmatpush1.bf16.msra.mxu0 0
        %611 = vmatprep.subr.bf16.mxu0 0
        %612 = vmatpush1.bf16.msra.mxu0 0
        %613 = vmatprep.subr.bf16.mxu0 0
        %614 = vmatpush1.bf16.msra.mxu0 0
        %615 = vmatprep.mubr.bf16.mxu0 0
        %616 = vmatmul.mubr.bf16.gmra.mrb[0].mxu0 %v511
        %v617 = vpop.f32.mrb[0].mxu0
        %v618 = vadd.f32 %v533, %v617
        %v619 = vpop.f32.mrb[0].mxu0
        %v620 = vpop.f32.mrb[0].mxu0
        %v621 = vpop.f32.mrb[0].mxu0
        %622 = vdwg.mxu0
        %v623 = vpack.c.bf16 %v618, %v618
        %624 = vst [vmem:[%s253] sm:$0xf] %v623
        %s625 = sand.u32 %s161, 1
        %s626 = scalar_lea.sflag [#allocation5], %s625
        %s627 = sand.u32 %s161, 1
        %s628 = smul.addr %s627, 4
        %s629 = scalar_lea.vmem [#allocation4], %s628
        // Predicated region
        $region45: #{ngram_forward.1} parent=39 // pred_check
          %p630 = pneg %p171
        $region46: #{ngram_forward.1} parent=39 // pred_check_branch
          %632 = sbr.rel (%p630) target = $region48
        $region47: #{ngram_forward.1} parent=39 // pred_region
          %s634 = ssub.s32 64, 64
          %635 = vsyncadd %s626, %s634
          %s636 = sadd.s32 %s24, %s23
          %s637 = smul.addr %s636, 64
          %s638 = scalar_lea.hbm %s5, %s637
          %s640 = sshll.u32 %s629, 4
          %s641 = int_to_ptr.vmem [resolvable:$true] %s640
          %643 = dma.vmem_to_hbm [thread:$0]  %s641, 64, %s638, %s626
        $region48: #{ngram_forward.1} parent=39 // pred_fallthru
          _
      $region40: #{ngram_forward.1} parent=5 // pred_fallthru
        _
      %p644 = scmp.le.s32.totalorder 2, %s14
      // Predicated region
      $region49: #{ngram_forward.1} parent=5 // pred_check
        %p645 = pneg %p644
      $region50: #{ngram_forward.1} parent=5 // pred_check_branch
        %647 = sbr.rel (%p645) target = $region52
      $region51: #{ngram_forward.1} parent=5 // pred_region
        %s648 = ssub.s32 %s14, 2
        // Predicated region
        $region53: #{ngram_forward.1} parent=51 // pred_check
          %p649 = pneg %p177
        $region54: #{ngram_forward.1} parent=51 // pred_check_branch
          %651 = sbr.rel (%p649) target = $region56
        $region55: #{ngram_forward.1} parent=51 // pred_region
          %s652 = sand.u32 %s162, 1
          %s653 = scalar_lea.sflag [#allocation5], %s652
          %s654 = sand.u32 %s162, 1
          %s655 = smul.addr %s654, 4
          %s656 = scalar_lea.vmem [#allocation4], %s655
          %657 = dma.done %s653, 64
        $region56: #{ngram_forward.1} parent=51 // pred_fallthru
          _
      $region52: #{ngram_forward.1} parent=5 // pred_fallthru
        _
    $region6: #{ngram_forward.1} parent=1 // loop_footer
      %s18 = sadd.s32 1, %s14
    $region7: #{ngram_forward.1} parent=1 // loop_footer_branch
      %13 = sbr.rel target = $region3
    $region8: #{ngram_forward.1} parent=1 // loop_exit
      _
    %658 = vsyncpa [#allocation5], 1
    %s659 = scalar_lea.sflag [#allocation5], 1
    %660 = vsyncpa %s659, 1

</llo_original>
